<compile_context>
chip_gen: v6e
topology: v6e:2x2x1
jax: 0.10.0
libtpu: 0.0.40
codegen_flags: <defaults>
</compile_context>

<pallas_src>
import functools
import math
import numpy as np
import jax
import jax.numpy as jnp
from jax.experimental import pallas as pl
from jax.experimental.pallas import tpu as pltpu


# ----------------------------- fused Pallas kernel -----------------------------

def _fused_post_kernel(x_ref, wn_ref, bn_ref, wh_ref, bh_ref, dec_ref, out_ref,
                       *, num_anchors, num_classes):
    """Channels on sublanes, positions (H*W = 256) on lanes.

    Output slab rows: [ sigmoid scores (A*nc) | per-anchor max score (A) |
                        dir argmax as f32 (A) | decoded boxes (A*7) ].
    """
    A, nc = num_anchors, num_classes
    ncls = A * nc
    nreg = A * 7

    # --- neck: depth-collapse 1x1 conv (channel matmul) + ReLU; bf16 MXU, f32 accum ---
    x = x_ref[...].astype(jnp.bfloat16)
    neck = jnp.dot(wn_ref[...], x, preferred_element_type=jnp.float32) + bn_ref[...]
    neck = jnp.maximum(neck, 0.0)

    # --- cls/reg/dir heads as ONE matmul: rows [cls(6) | reg(14) | dir(4)] ---
    head = jnp.dot(wh_ref[...], neck.astype(jnp.bfloat16),
                   preferred_element_type=jnp.float32) + bh_ref[...]

    cls_logits = head[0:ncls, :]
    reg = head[ncls:ncls + nreg, :]
    dirp = head[ncls + nreg:ncls + nreg + 2 * A, :]

    # --- sigmoid scores (exp on EUP, exact divide; lane-dense store) ---
    scores = 1.0 / (1.0 + jnp.exp(-cls_logits))
    out_ref[0:ncls, :] = scores

    # --- per-anchor class max & direction argmax (A=2 -> 4 lane-dense rows) ---
    for a in range(A):
        out_ref[ncls + a:ncls + a + 1, :] = jnp.max(
            scores[a * nc:(a + 1) * nc, :], axis=0, keepdims=True)
        out_ref[ncls + A + a:ncls + A + a + 1, :] = (
            dirp[2 * a + 1:2 * a + 2, :] > dirp[2 * a:2 * a + 1, :]
        ).astype(jnp.float32)

    # --- fully vectorized DeltaXYZWLHR decode over the whole (A*7, P) slab ---
    # per-anchor row order of `reg`/output: [x, y, z, w, l, h, r]
    #   mult rows  = [diag, diag, ha, wa, la, ha, 1]
    #   add  rows  = [xa,   ya,   za+ha/2, 0, 0, 0, ra]
    #   emask rows = exp() applied to w/l/h rows only
    #   zfix rows  = -0.5 on z rows (zg -= hg/2)
    mult = dec_ref[0]
    add = dec_ref[1]
    emask = dec_ref[2]
    zfix = dec_ref[3]

    t = jnp.where(emask > 0.5, jnp.exp(reg), reg)       # one wide EUP exp + select
    boxes0 = t * mult + add                              # full-tile mul/add
    # bring hg (row 7a+5) onto the z row (7a+2): static 3-row sublane shift
    hshift = jnp.concatenate([boxes0[3:, :], boxes0[:3, :]], axis=0)
    boxes = boxes0 + zfix * hshift                       # only z rows touched (zfix=0 elsewhere)

    out_ref[ncls + 2 * A:ncls + 2 * A + nreg, :] = boxes


def fused_post(x, wn, bn, wh, bh, dec, *, num_anchors, num_classes):
    """x: (Cin, P) f32; wn/wh bf16 weights; dec: (4, A*7, P) decode constants."""
    cin, P = x.shape
    c_neck = wn.shape[0]
    n_head = wh.shape[0]
    ncls = num_anchors * num_classes
    nreg = num_anchors * 7
    assert n_head == ncls + nreg + num_anchors * 2
    n_out = ncls + 2 * num_anchors + nreg  # 24 rows

    kernel = functools.partial(_fused_post_kernel,
                               num_anchors=num_anchors, num_classes=num_classes)
    return pl.pallas_call(
        kernel,
        out_shape=jax.ShapeDtypeStruct((n_out, P), jnp.float32),
        grid=(1,),
        in_specs=[
            pl.BlockSpec((cin, P), lambda i: (0, 0)),
            pl.BlockSpec((c_neck, cin), lambda i: (0, 0)),
            pl.BlockSpec((c_neck, 1), lambda i: (0, 0)),
            pl.BlockSpec((n_head, c_neck), lambda i: (0, 0)),
            pl.BlockSpec((n_head, 1), lambda i: (0, 0)),
            pl.BlockSpec((4, nreg, P), lambda i: (0, 0, 0)),
        ],
        out_specs=pl.BlockSpec((n_out, P), lambda i: (0, 0)),
        compiler_params=pltpu.CompilerParams(dimension_semantics=("arbitrary",)),
    )(x, wn, bn, wh, bh, dec)


# ----------------------------- pure-JAX reference decode -----------------------------

def decode_jax(anchors, deltas):
    xa, ya, za, wa, la, ha, ra = jnp.split(anchors, 7, axis=-1)
    xt, yt, zt, wt, lt, ht, rt = jnp.split(deltas, 7, axis=-1)
    za = za + ha / 2
    diagonal = jnp.sqrt(la ** 2 + wa ** 2)
    xg = xt * diagonal + xa
    yg = yt * diagonal + ya
    zg = zt * ha + za
    lg = jnp.exp(lt) * la
    wg = jnp.exp(wt) * wa
    hg = jnp.exp(ht) * ha
    rg = rt + ra
    zg = zg - hg / 2
    return jnp.concatenate([xg, yg, zg, wg, lg, hg, rg], axis=-1)


# ----------------------------- Model wrapper -----------------------------

class TRTModelPostPallas:
    def __init__(self, key, *, c_in=8, dz=4, h=16, w=16, c_neck=32,
                 num_anchors=2, num_classes=3, box_code_size=7, nms_pre=128):
        self.h, self.w = h, w
        self.num_anchors = num_anchors
        self.num_classes = num_classes
        self.box_code_size = box_code_size
        self.nms_pre = nms_pre  # original module uses 1000; shrunk for the small map

        k = jax.random.split(key, 8)
        sc = 0.1
        cin_neck = c_in * dz
        # weights stored transposed: (out_channels, in_channels); heads concatenated
        self.w_neck_f32 = sc * jax.random.normal(k[0], (c_neck, cin_neck), jnp.float32)
        self.b_neck = sc * jax.random.normal(k[1], (c_neck, 1), jnp.float32)
        w_cls = sc * jax.random.normal(k[2], (num_anchors * num_classes, c_neck), jnp.float32)
        b_cls = sc * jax.random.normal(k[3], (num_anchors * num_classes, 1), jnp.float32)
        w_reg = sc * jax.random.normal(k[4], (num_anchors * box_code_size, c_neck), jnp.float32)
        b_reg = sc * jax.random.normal(k[5], (num_anchors * box_code_size, 1), jnp.float32)
        w_dir = sc * jax.random.normal(k[6], (num_anchors * 2, c_neck), jnp.float32)
        b_dir = sc * jax.random.normal(k[7], (num_anchors * 2, 1), jnp.float32)
        self.w_heads_f32 = jnp.concatenate([w_cls, w_reg, w_dir], axis=0)   # (24, c_neck)
        self.b_heads = jnp.concatenate([b_cls, b_reg, b_dir], axis=0)       # (24, 1)
        # bf16 MXU copies (one-time cast at init)
        self.w_neck_bf16 = self.w_neck_f32.astype(jnp.bfloat16)
        self.w_heads_bf16 = self.w_heads_f32.astype(jnp.bfloat16)

        # deterministic anchors (stand-in for 'example-data/anchors.tensor'):
        # (H*W, A, 7) with [x, y, z, w, l, h, r]; flat index = pos*A + a
        hw = h * w
        ys, xs = np.meshgrid(np.arange(h, dtype=np.float32),
                             np.arange(w, dtype=np.float32), indexing="ij")
        cx = (xs.reshape(-1) + 0.5).astype(np.float32)   # (P,)
        cy = (ys.reshape(-1) + 0.5).astype(np.float32)
        za_const = -1.0
        base = np.array([[1.6, 3.9, 1.56, 0.0],
                         [1.6, 3.9, 1.56, np.pi / 2]], dtype=np.float32)  # (A, [w,l,h,r])
        anchors = np.zeros((hw, num_anchors, 7), dtype=np.float32)
        anchors[:, :, 0] = cx[:, None]
        anchors[:, :, 1] = cy[:, None]
        anchors[:, :, 2] = za_const
        anchors[:, :, 3:7] = base[None, :, :]
        self.anchors_flat = jnp.asarray(anchors.reshape(hw * num_anchors, 7))

        # precomputed per-row decode constants, lane-broadcast to P (host-side, once):
        #   planes: [mult, add, exp_mask, z_fix], shape (4, A*7, P)
        nreg = num_anchors * box_code_size
        mult = np.zeros((nreg, hw), np.float32)
        add = np.zeros((nreg, hw), np.float32)
        emask = np.zeros((nreg, hw), np.float32)
        zfix = np.zeros((nreg, hw), np.float32)
        for a in range(num_anchors):
            wa, la, ha, ra = base[a]
            diag = math.sqrt(float(la) ** 2 + float(wa) ** 2)
            r = 7 * a
            mult[r + 0] = diag; mult[r + 1] = diag; mult[r + 2] = ha
            mult[r + 3] = wa;   mult[r + 4] = la;   mult[r + 5] = ha
            mult[r + 6] = 1.0
            add[r + 0] = cx
            add[r + 1] = cy
            add[r + 2] = za_const + 0.5 * ha
            add[r + 6] = ra
            emask[r + 3:r + 6] = 1.0
            zfix[r + 2] = -0.5
        self.dec_consts = jnp.asarray(np.stack([mult, add, emask, zfix], axis=0))

        self._forward_jit = jax.jit(self._forward)
        self._pre_topk_jit = jax.jit(self._pre_topk)

    # kernel path, before the top-k selection
    def _pre_topk(self, mlvl_volumes):
        n, c, dz, h, w = mlvl_volumes.shape
        P = h * w
        A, nc = self.num_anchors, self.num_classes
        ncls, nreg = A * nc, A * 7

        # channels-on-sublane / positions-on-lane layout: pure reshape, no transpose
        x = mlvl_volumes.reshape(c * dz, P)

        slab = fused_post(x, self.w_neck_bf16, self.b_neck,
                          self.w_heads_bf16, self.b_heads, self.dec_consts,
                          num_anchors=A, num_classes=nc)

        scores_t = slab[0:ncls]                      # (A*nc, P)
        maxsc_t = slab[ncls:ncls + A]                # (A, P)
        dir_t = slab[ncls + A:ncls + 2 * A]          # (A, P) f32 in {0,1}
        boxes_t = slab[ncls + 2 * A:]                # (A*7, P)

        # reorder to the reference's permute(1,2,0).reshape(-1,k): flat idx = pos*A + a
        a_total = P * A
        scores_all = scores_t.reshape(A, nc, P).transpose(2, 0, 1).reshape(a_total, nc)
        boxes_all = boxes_t.reshape(A, self.box_code_size, P).transpose(2, 0, 1) \
                           .reshape(a_total, self.box_code_size)
        max_all = maxsc_t.T.reshape(a_total)
        dir_all = dir_t.T.reshape(a_total).astype(jnp.int32)
        return scores_all, boxes_all, max_all, dir_all

    def _forward(self, mlvl_volumes):
        scores_all, boxes_all, max_all, dir_all = self._pre_topk(mlvl_volumes)
        _, topk_inds = jax.lax.top_k(max_all, self.nms_pre)
        scores = jnp.take(scores_all, topk_inds, axis=0)
        bboxes = jnp.take(boxes_all, topk_inds, axis=0)
        dir_cls_score = jnp.take(dir_all, topk_inds, axis=0)
        return scores, bboxes, dir_cls_score

    # pure-JAX f32 reference (same synthetic weights), before top-k, for validation
    def reference_pre_topk(self, mlvl_volumes):
        n, c, dz, h, w = mlvl_volumes.shape
        P = h * w
        A, nc = self.num_anchors, self.num_classes
        ncls, nreg = A * nc, A * 7
        x = mlvl_volumes.reshape(c * dz, P)
        neck = jnp.maximum(self.w_neck_f32 @ x + self.b_neck, 0.0)
        head = self.w_heads_f32 @ neck + self.b_heads
        scores = 1.0 / (1.0 + jnp.exp(-head[0:ncls]))
        reg = head[ncls:ncls + nreg]
        dirp = head[ncls + nreg:]
        a_total = P * A
        scores_all = scores.reshape(A, nc, P).transpose(2, 0, 1).reshape(a_total, nc)
        deltas = reg.reshape(A, 7, P).transpose(2, 0, 1).reshape(a_total, 7)
        dirv = dirp.reshape(A, 2, P).transpose(2, 0, 1).reshape(a_total, 2)
        dir_all = jnp.argmax(dirv, axis=-1).astype(jnp.int32)
        max_all = scores_all.max(axis=-1)
        boxes_all = decode_jax(self.anchors_flat, deltas)
        return scores_all, boxes_all, max_all, dir_all

    def __call__(self, mlvl_volumes):
        return self._forward_jit(mlvl_volumes)


# ----------------------------- main -----------------------------

if __name__ == "__main__":
    key = jax.random.PRNGKey(0)
    k_in, k_par = jax.random.split(key)
    model = TRTModelPostPallas(k_par)

    mlvl_volumes = jax.random.normal(k_in, (1, 8, 4, 16, 16), jnp.float32)

    scores, bboxes, dir_cls_score = model(mlvl_volumes)
    jax.block_until_ready((scores, bboxes, dir_cls_score))

    assert scores.shape == (128, 3)
    assert bboxes.shape == (128, 7)
    assert dir_cls_score.shape == (128,)
    assert bool(jnp.all(jnp.isfinite(scores))) and bool(jnp.all(jnp.isfinite(bboxes)))

    # correctness vs. pure-JAX f32 reference, compared pre-top-k (robust to near-tie
    # ranking swaps); tolerances cover the intentional bf16 matmul inputs.
    ks, kb, km, kd = model._pre_topk_jit(mlvl_volumes)
    rs, rb, rm, rd = model.reference_pre_topk(mlvl_volumes)
    np.testing.assert_allclose(np.asarray(ks), np.asarray(rs), rtol=5e-2, atol=5e-2)
    np.testing.assert_allclose(np.asarray(kb), np.asarray(rb), rtol=5e-2, atol=5e-2)
    np.testing.assert_allclose(np.asarray(km), np.asarray(rm), rtol=5e-2, atol=5e-2)
    dir_mismatch = float(jnp.mean((kd != rd).astype(jnp.float32)))
    assert dir_mismatch <= 0.05  # only near-tie direction logits may flip under bf16

    print("KERNEL_OK")
</pallas_src>

<mosaic_0001>
module attributes {stable_mosaic.version = 11 : i64} {
  func.func @_fused_post_kernel(%arg0: i32, %arg1: memref<32x256xf32, #tpu.memory_space<vmem>>, %arg2: memref<32x32xbf16, #tpu.memory_space<vmem>>, %arg3: memref<32x1xf32, #tpu.memory_space<vmem>>, %arg4: memref<24x32xbf16, #tpu.memory_space<vmem>>, %arg5: memref<24x1xf32, #tpu.memory_space<vmem>>, %arg6: memref<4x14x256xf32, #tpu.memory_space<vmem>>, %arg7: memref<24x256xf32, #tpu.memory_space<vmem>>) attributes {dimension_semantics = [#tpu.dimension_semantics<arbitrary>], iteration_bounds = array<i64: 1>, scalar_prefetch = 0 : i64, scratch_operands = 0 : i64, tpu.core_type = #tpu.core_type<tc>, window_params = [{pipeline_mode = #tpu.pipeline_mode<synchronous>, transform_indices = @transform_0, window_bounds = array<i64: 32, 256>}, {pipeline_mode = #tpu.pipeline_mode<synchronous>, transform_indices = @transform_1, window_bounds = array<i64: 32, 32>}, {pipeline_mode = #tpu.pipeline_mode<synchronous>, transform_indices = @transform_2, window_bounds = array<i64: 32, 1>}, {pipeline_mode = #tpu.pipeline_mode<synchronous>, transform_indices = @transform_3, window_bounds = array<i64: 24, 32>}, {pipeline_mode = #tpu.pipeline_mode<synchronous>, transform_indices = @transform_4, window_bounds = array<i64: 24, 1>}, {pipeline_mode = #tpu.pipeline_mode<synchronous>, transform_indices = @transform_5, window_bounds = array<i64: 4, 14, 256>}, {pipeline_mode = #tpu.pipeline_mode<synchronous>, transform_indices = @transform_6, window_bounds = array<i64: 24, 256>}]} {
    %c0 = arith.constant 0 : index
    %c0_0 = arith.constant 0 : index
    %0 = vector.load %arg1[%c0, %c0_0] : memref<32x256xf32, #tpu.memory_space<vmem>>, vector<32x256xf32>
    %1 = arith.truncf %0 : vector<32x256xf32> to vector<32x256xbf16>
    %c0_1 = arith.constant 0 : index
    %c0_2 = arith.constant 0 : index
    %2 = vector.load %arg2[%c0_1, %c0_2] : memref<32x32xbf16, #tpu.memory_space<vmem>>, vector<32x32xbf16>
    %cst = arith.constant dense<0.000000e+00> : vector<32x256xf32>
    %3 = tpu.matmul %2, %1, %cst {dimension_numbers = #tpu.dot_dimension_numbers<[1], [0], [0], [1], [0, 0, 1, 1], [], []>} : vector<32x32xbf16>, vector<32x256xbf16>, vector<32x256xf32> -> vector<32x256xf32>
    %c0_3 = arith.constant 0 : index
    %c0_4 = arith.constant 0 : index
    %4 = vector.load %arg3[%c0_3, %c0_4] : memref<32x1xf32, #tpu.memory_space<vmem>>, vector<32x1xf32>
    %5 = vector.broadcast %4 : vector<32x1xf32> to vector<32x256xf32>
    %6 = arith.addf %3, %5 : vector<32x256xf32>
    %cst_5 = arith.constant 0.000000e+00 : f32
    %7 = vector.broadcast %cst_5 : f32 to vector<32x256xf32>
    %8 = arith.maximumf %6, %7 : vector<32x256xf32>
    %c0_6 = arith.constant 0 : index
    %c0_7 = arith.constant 0 : index
    %9 = vector.load %arg4[%c0_6, %c0_7] : memref<24x32xbf16, #tpu.memory_space<vmem>>, vector<24x32xbf16>
    %10 = arith.truncf %8 : vector<32x256xf32> to vector<32x256xbf16>
    %cst_8 = arith.constant dense<0.000000e+00> : vector<24x256xf32>
    %11 = tpu.matmul %9, %10, %cst_8 {dimension_numbers = #tpu.dot_dimension_numbers<[1], [0], [0], [1], [0, 0, 1, 1], [], []>} : vector<24x32xbf16>, vector<32x256xbf16>, vector<24x256xf32> -> vector<24x256xf32>
    %c0_9 = arith.constant 0 : index
    %c0_10 = arith.constant 0 : index
    %12 = vector.load %arg5[%c0_9, %c0_10] : memref<24x1xf32, #tpu.memory_space<vmem>>, vector<24x1xf32>
    %13 = vector.broadcast %12 : vector<24x1xf32> to vector<24x256xf32>
    %14 = arith.addf %11, %13 : vector<24x256xf32>
    %15 = vector.extract_strided_slice %14 {offsets = [0, 0], sizes = [6, 256], strides = [1, 1]} : vector<24x256xf32> to vector<6x256xf32>
    %16 = vector.extract_strided_slice %14 {offsets = [6, 0], sizes = [14, 256], strides = [1, 1]} : vector<24x256xf32> to vector<14x256xf32>
    %17 = vector.extract_strided_slice %14 {offsets = [20, 0], sizes = [4, 256], strides = [1, 1]} : vector<24x256xf32> to vector<4x256xf32>
    %cst_11 = arith.constant 0.000000e+00 : f32
    %18 = vector.broadcast %cst_11 : f32 to vector<6x256xf32>
    %19 = arith.subf %18, %15 : vector<6x256xf32>
    %20 = math.exp %19 : vector<6x256xf32>
    %cst_12 = arith.constant 1.000000e+00 : f32
    %21 = vector.broadcast %cst_12 : f32 to vector<6x256xf32>
    %22 = arith.addf %21, %20 : vector<6x256xf32>
    %cst_13 = arith.constant 1.000000e+00 : f32
    %23 = vector.broadcast %cst_13 : f32 to vector<6x256xf32>
    %24 = arith.divf %23, %22 : vector<6x256xf32>
    %c0_14 = arith.constant 0 : index
    %c0_15 = arith.constant 0 : index
    %25 = vector.load %arg7[%c0_14, %c0_15] : memref<24x256xf32, #tpu.memory_space<vmem>>, vector<6x256xf32>
    tpu.vector_store %arg7[%c0_14, %c0_15], %24 {strides = array<i32>} : memref<24x256xf32, #tpu.memory_space<vmem>>, vector<6x256xf32>,
    %26 = vector.extract_strided_slice %24 {offsets = [0, 0], sizes = [3, 256], strides = [1, 1]} : vector<6x256xf32> to vector<3x256xf32>
    %cst_16 = arith.constant dense<0xFF800000> : vector<256xf32>
    %27 = vector.multi_reduction <maximumf>, %26, %cst_16 [0] : vector<3x256xf32> to vector<256xf32>
    %28 = vector.shape_cast %27 : vector<256xf32> to vector<1x256xf32>
    %c6 = arith.constant 6 : index
    %c0_17 = arith.constant 0 : index
    %29 = vector.load %arg7[%c6, %c0_17] : memref<24x256xf32, #tpu.memory_space<vmem>>, vector<1x256xf32>
    tpu.vector_store %arg7[%c6, %c0_17], %28 {strides = array<i32>} : memref<24x256xf32, #tpu.memory_space<vmem>>, vector<1x256xf32>,
    %30 = vector.extract_strided_slice %17 {offsets = [1, 0], sizes = [1, 256], strides = [1, 1]} : vector<4x256xf32> to vector<1x256xf32>
    %31 = vector.extract_strided_slice %17 {offsets = [0, 0], sizes = [1, 256], strides = [1, 1]} : vector<4x256xf32> to vector<1x256xf32>
    %32 = arith.cmpf ogt, %30, %31 : vector<1x256xf32>
    %33 = arith.extui %32 : vector<1x256xi1> to vector<1x256xi32>
    %34 = arith.sitofp %33 : vector<1x256xi32> to vector<1x256xf32>
    %c8 = arith.constant 8 : index
    %c0_18 = arith.constant 0 : index
    %35 = vector.load %arg7[%c8, %c0_18] : memref<24x256xf32, #tpu.memory_space<vmem>>, vector<1x256xf32>
    tpu.vector_store %arg7[%c8, %c0_18], %34 {strides = array<i32>} : memref<24x256xf32, #tpu.memory_space<vmem>>, vector<1x256xf32>,
    %36 = vector.extract_strided_slice %24 {offsets = [3, 0], sizes = [3, 256], strides = [1, 1]} : vector<6x256xf32> to vector<3x256xf32>
    %cst_19 = arith.constant dense<0xFF800000> : vector<256xf32>
    %37 = vector.multi_reduction <maximumf>, %36, %cst_19 [0] : vector<3x256xf32> to vector<256xf32>
    %38 = vector.shape_cast %37 : vector<256xf32> to vector<1x256xf32>
    %c7 = arith.constant 7 : index
    %c0_20 = arith.constant 0 : index
    %39 = vector.load %arg7[%c7, %c0_20] : memref<24x256xf32, #tpu.memory_space<vmem>>, vector<1x256xf32>
    tpu.vector_store %arg7[%c7, %c0_20], %38 {strides = array<i32>} : memref<24x256xf32, #tpu.memory_space<vmem>>, vector<1x256xf32>,
    %40 = vector.extract_strided_slice %17 {offsets = [3, 0], sizes = [1, 256], strides = [1, 1]} : vector<4x256xf32> to vector<1x256xf32>
    %41 = vector.extract_strided_slice %17 {offsets = [2, 0], sizes = [1, 256], strides = [1, 1]} : vector<4x256xf32> to vector<1x256xf32>
    %42 = arith.cmpf ogt, %40, %41 : vector<1x256xf32>
    %43 = arith.extui %42 : vector<1x256xi1> to vector<1x256xi32>
    %44 = arith.sitofp %43 : vector<1x256xi32> to vector<1x256xf32>
    %c9 = arith.constant 9 : index
    %c0_21 = arith.constant 0 : index
    %45 = vector.load %arg7[%c9, %c0_21] : memref<24x256xf32, #tpu.memory_space<vmem>>, vector<1x256xf32>
    tpu.vector_store %arg7[%c9, %c0_21], %44 {strides = array<i32>} : memref<24x256xf32, #tpu.memory_space<vmem>>, vector<1x256xf32>,
    %c0_22 = arith.constant 0 : index
    %c0_23 = arith.constant 0 : index
    %c0_24 = arith.constant 0 : index
    %46 = vector.load %arg6[%c0_22, %c0_23, %c0_24] : memref<4x14x256xf32, #tpu.memory_space<vmem>>, vector<1x14x256xf32>
    %47 = vector.shape_cast %46 : vector<1x14x256xf32> to vector<14x256xf32>
    %c1 = arith.constant 1 : index
    %c0_25 = arith.constant 0 : index
    %c0_26 = arith.constant 0 : index
    %48 = vector.load %arg6[%c1, %c0_25, %c0_26] : memref<4x14x256xf32, #tpu.memory_space<vmem>>, vector<1x14x256xf32>
    %49 = vector.shape_cast %48 : vector<1x14x256xf32> to vector<14x256xf32>
    %c2 = arith.constant 2 : index
    %c0_27 = arith.constant 0 : index
    %c0_28 = arith.constant 0 : index
    %50 = vector.load %arg6[%c2, %c0_27, %c0_28] : memref<4x14x256xf32, #tpu.memory_space<vmem>>, vector<1x14x256xf32>
    %51 = vector.shape_cast %50 : vector<1x14x256xf32> to vector<14x256xf32>
    %c3 = arith.constant 3 : index
    %c0_29 = arith.constant 0 : index
    %c0_30 = arith.constant 0 : index
    %52 = vector.load %arg6[%c3, %c0_29, %c0_30] : memref<4x14x256xf32, #tpu.memory_space<vmem>>, vector<1x14x256xf32>
    %53 = vector.shape_cast %52 : vector<1x14x256xf32> to vector<14x256xf32>
    %cst_31 = arith.constant 5.000000e-01 : f32
    %54 = vector.broadcast %cst_31 : f32 to vector<14x256xf32>
    %55 = arith.cmpf ogt, %51, %54 : vector<14x256xf32>
    %56 = math.exp %16 : vector<14x256xf32>
    %57 = arith.select %55, %56, %16 : vector<14x256xi1>, vector<14x256xf32>
    %58 = arith.mulf %57, %47 : vector<14x256xf32>
    %59 = arith.addf %58, %49 : vector<14x256xf32>
    %60 = vector.extract_strided_slice %59 {offsets = [3, 0], sizes = [11, 256], strides = [1, 1]} : vector<14x256xf32> to vector<11x256xf32>
    %61 = vector.extract_strided_slice %59 {offsets = [0, 0], sizes = [3, 256], strides = [1, 1]} : vector<14x256xf32> to vector<3x256xf32>
    %62 = tpu.concatenate %60, %61 in 0 : vector<11x256xf32>, vector<3x256xf32> -> vector<14x256xf32>
    %63 = arith.mulf %53, %62 : vector<14x256xf32>
    %64 = arith.addf %59, %63 : vector<14x256xf32>
    %c10 = arith.constant 10 : index
    %c0_32 = arith.constant 0 : index
    %65 = vector.load %arg7[%c10, %c0_32] : memref<24x256xf32, #tpu.memory_space<vmem>>, vector<14x256xf32>
    tpu.vector_store %arg7[%c10, %c0_32], %64 {strides = array<i32>} : memref<24x256xf32, #tpu.memory_space<vmem>>, vector<14x256xf32>,
    return
  }
  func.func @transform_0(%arg0: i32) -> (i32, i32) {
    %c0_i32 = arith.constant 0 : i32
    %c0_i32_0 = arith.constant 0 : i32
    %c0_i32_1 = arith.constant 0 : i32
    return %c0_i32, %c0_i32_0 : i32, i32
  }
  func.func @transform_1(%arg0: i32) -> (i32, i32) {
    %c0_i32 = arith.constant 0 : i32
    %c0_i32_0 = arith.constant 0 : i32
    %c0_i32_1 = arith.constant 0 : i32
    return %c0_i32, %c0_i32_0 : i32, i32
  }
  func.func @transform_2(%arg0: i32) -> (i32, i32) {
    %c0_i32 = arith.constant 0 : i32
    %c0_i32_0 = arith.constant 0 : i32
    %c0_i32_1 = arith.constant 0 : i32
    return %c0_i32, %c0_i32_0 : i32, i32
  }
  func.func @transform_3(%arg0: i32) -> (i32, i32) {
    %c0_i32 = arith.constant 0 : i32
    %c0_i32_0 = arith.constant 0 : i32
    %c0_i32_1 = arith.constant 0 : i32
    return %c0_i32, %c0_i32_0 : i32, i32
  }
  func.func @transform_4(%arg0: i32) -> (i32, i32) {
    %c0_i32 = arith.constant 0 : i32
    %c0_i32_0 = arith.constant 0 : i32
    %c0_i32_1 = arith.constant 0 : i32
    return %c0_i32, %c0_i32_0 : i32, i32
  }
  func.func @transform_5(%arg0: i32) -> (i32, i32, i32) {
    %c0_i32 = arith.constant 0 : i32
    %c0_i32_0 = arith.constant 0 : i32
    %c0_i32_1 = arith.constant 0 : i32
    %c0_i32_2 = arith.constant 0 : i32
    return %c0_i32, %c0_i32_0, %c0_i32_1 : i32, i32, i32
  }
  func.func @transform_6(%arg0: i32) -> (i32, i32) {
    %c0_i32 = arith.constant 0 : i32
    %c0_i32_0 = arith.constant 0 : i32
    %c0_i32_1 = arith.constant 0 : i32
    return %c0_i32, %c0_i32_0 : i32, i32
  }
}

</mosaic_0001>

<llo_original>
// kernel: _forward.1
$region0: #{_forward.1}
  #allocation0 [shape = 'u32[]', space=smem, size = 0x4, offset = 0x4, fixed_abs, tag = 'smem constant byte address 0x4 - core index']
  #allocation1 [shape = 'u32[144,128]{1,0:T(1,128)}', space=vmem, size = 0x12000, scoped, tag = 'internal scratch']
  %s0 = inlined_call_operand.vmem [shape: f32[32,256], index: 0, kind: input, shape index: {}]
  %s1 = inlined_call_operand.vmem [shape: bf16[32,32], index: 1, kind: input, shape index: {}]
  %s2 = inlined_call_operand.vmem [shape: f32[32,1], index: 2, kind: input, shape index: {}]
  %s3 = inlined_call_operand.vmem [shape: bf16[24,32], index: 3, kind: input, shape index: {}]
  %s4 = inlined_call_operand.vmem [shape: f32[24,1], index: 4, kind: input, shape index: {}]
  %s5 = inlined_call_operand.vmem [shape: f32[4,14,256], index: 5, kind: input, shape index: {}]
  %s6 = inlined_call_operand.vmem [shape: f32[24,256], index: 6, kind: output, shape index: {}]
  %s7 = sld [smem:[#allocation0]]
  $region34: #{_forward.1} parent=0
    _
  %s9 = ssub.s32 1, %s7
  %s10 = scalar_select 0, %s9, %s7
  // Predicated region
  $region2: #{_forward.1} parent=0 // pred_check
    _
  $region3: #{_forward.1} parent=0 // pred_check_branch
    %12 = sbr.rel (0) target = $region5
  $region4: #{_forward.1} parent=0 // pred_region
    _
  $region5: #{_forward.1} parent=0 // pred_fallthru
    _
  // Predicated region
  $region6: #{_forward.1} parent=0 // pred_check
    _
  $region7: #{_forward.1} parent=0 // pred_check_branch
    %14 = sbr.rel (0) target = $region9
  $region8: #{_forward.1} parent=0 // pred_region
    _
  $region9: #{_forward.1} parent=0 // pred_fallthru
    _
  // Predicated region
  $region10: #{_forward.1} parent=0 // pred_check
    _
  $region11: #{_forward.1} parent=0 // pred_check_branch
    %16 = sbr.rel (0) target = $region13
  $region12: #{_forward.1} parent=0 // pred_region
    _
  $region13: #{_forward.1} parent=0 // pred_fallthru
    _
  // Predicated region
  $region14: #{_forward.1} parent=0 // pred_check
    _
  $region15: #{_forward.1} parent=0 // pred_check_branch
    %18 = sbr.rel (0) target = $region17
  $region16: #{_forward.1} parent=0 // pred_region
    _
  $region17: #{_forward.1} parent=0 // pred_fallthru
    _
  // Predicated region
  $region18: #{_forward.1} parent=0 // pred_check
    _
  $region19: #{_forward.1} parent=0 // pred_check_branch
    %20 = sbr.rel (0) target = $region21
  $region20: #{_forward.1} parent=0 // pred_region
    _
  $region21: #{_forward.1} parent=0 // pred_fallthru
    _
  // Predicated region
  $region22: #{_forward.1} parent=0 // pred_check
    _
  $region23: #{_forward.1} parent=0 // pred_check_branch
    %22 = sbr.rel (0) target = $region25
  $region24: #{_forward.1} parent=0 // pred_region
    _
  $region25: #{_forward.1} parent=0 // pred_fallthru
    _
  %v24 = vld [vmem:[%s0] sm:$0xff]
  %v25 = vld [vmem:[%s0 + $0x8] sm:$0xff]
  %v26 = vld [vmem:[%s0 + $0x10] sm:$0xff]
  %v27 = vld [vmem:[%s0 + $0x18] sm:$0xff]
  %v28 = vld [vmem:[%s0 + $0x20] sm:$0xff]
  %v29 = vld [vmem:[%s0 + $0x28] sm:$0xff]
  %v30 = vld [vmem:[%s0 + $0x30] sm:$0xff]
  %v31 = vld [vmem:[%s0 + $0x38] sm:$0xff]
  %v32 = vpack.c.bf16 %v26, %v24
  %v33 = vpack.c.bf16 %v27, %v25
  %v34 = vpack.c.bf16 %v30, %v28
  %v35 = vpack.c.bf16 %v31, %v29
  %v36 = vld [vmem:[%s1] sm:$0xf]
  %v37 = vld [vmem:[%s1 + $0x4] sm:$0xf]
  %v38 = vld [vmem:[%s1 + $0x8] sm:$0xf]
  %v39 = vld [vmem:[%s1 + $0xc] sm:$0xf]
  %v40 = vld [vmem:[%s2] sm:$0xff]
  %v41 = vld [vmem:[%s2 + $0x8] sm:$0xff]
  %v42 = vld [vmem:[%s2 + $0x10] sm:$0xff]
  %v43 = vld [vmem:[%s2 + $0x18] sm:$0xff]
  %45 = vset.pattern.permute.xlu0 0
  %46 = vperm.xlu0 %45, %v40
  %v47 = vpop.permute.xlu0 %46
  %50 = vset.pattern.permute.xlu0 0
  %51 = vperm.xlu0 %50, %v41
  %v52 = vpop.permute.xlu0 %51
  %55 = vset.pattern.permute.xlu0 0
  %56 = vperm.xlu0 %55, %v42
  %v57 = vpop.permute.xlu0 %56
  %60 = vset.pattern.permute.xlu0 0
  %61 = vperm.xlu0 %60, %v43
  %v62 = vpop.permute.xlu0 %61
  %v68 = vunpack.c.l.b16 %v36
  %v69 = vunpack.c.l.b16 %v37
  %v70 = vunpack.c.l.b16 %v38
  %v71 = vunpack.c.l.b16 %v39
  %v72 = vpack.c.b16 %v69, %v68
  %v73 = vpack.c.b16 %v71, %v70
  %vm74 = vcmask 261120
  %v76 = vsel %vm74, %v72, 0
  %v79 = vsel %vm74, %v73, 0
  %81 = vmatprep.subr.bf16.mxu0 0
  %82 = vmatpush1.bf16.msra.mxu0 0
  %83 = vmatprep.subr.bf16.mxu0 0
  %84 = vmatpush1.bf16.msra.mxu0 0
  %85 = vmatprep.subr.bf16.mxu0 0
  %86 = vmatpush1.bf16.msra.mxu0 0
  %87 = vmatprep.subr.bf16.mxu0 0
  %88 = vmatpush1.bf16.msra.mxu0 0
  %89 = vmatprep.subr.bf16.mxu0 0
  %90 = vmatpush1.bf16.msra.mxu0 0
  %91 = vmatprep.subr.bf16.mxu0 0
  %92 = vmatpush1.bf16.msra.mxu0 0
  %93 = vmatprep.subr.bf16.mxu0 %v35
  %94 = vmatpush1.bf16.msra.mxu0 %v34
  %95 = vmatprep.subr.bf16.mxu0 %v33
  %96 = vmatpush1.bf16.msra.mxu0 %v32
  %97 = vmatprep.subr.bf16.mxu0 0
  %98 = vmatpush2.bf16.msra.mxu0 0
  %99 = vmatprep.subr.bf16.mxu0 0
  %100 = vmatpush2.bf16.msra.mxu0 0
  %101 = vmatprep.subr.bf16.mxu0 0
  %102 = vmatpush2.bf16.msra.mxu0 0
  %103 = vmatprep.subr.bf16.mxu0 0
  %104 = vmatpush2.bf16.msra.mxu0 0
  %105 = vmatprep.subr.bf16.mxu0 0
  %106 = vmatpush2.bf16.msra.mxu0 0
  %107 = vmatprep.subr.bf16.mxu0 0
  %108 = vmatpush2.bf16.msra.mxu0 0
  %109 = vmatprep.subr.bf16.mxu0 0
  %110 = vmatpush2.bf16.msra.mxu0 0
  %111 = vmatprep.subr.bf16.mxu0 0
  %112 = vmatpush2.bf16.msra.mxu0 0
  %113 = vmatprep.mubr.bf16.mxu0 0
  %114 = vmatmul.mubr.bf16.gmra.mxu0 %v76
  %v115 = vpop.f32.mrf.mxu0
  %v116 = vadd.f32 %v47, %v115
  %v117 = vpop.f32.mrf.mxu0
  %v118 = vadd.f32 %v47, %v117
  %v119 = vpop.f32.mrf.mxu0
  %v120 = vadd.f32 %v52, %v119
  %v121 = vpop.f32.mrf.mxu0
  %v122 = vadd.f32 %v52, %v121
  %123 = vmatprep.mubr.bf16.mxu0 0
  %124 = vmatmul.mubr.bf16.gmra.mxu0 %v79
  %v125 = vpop.f32.mrf.mxu0
  %v126 = vadd.f32 %v57, %v125
  %v127 = vpop.f32.mrf.mxu0
  %v128 = vadd.f32 %v57, %v127
  %v129 = vpop.f32.mrf.mxu0
  %v130 = vadd.f32 %v62, %v129
  %v131 = vpop.f32.mrf.mxu0
  %v132 = vadd.f32 %v62, %v131
  %133 = vdwg.mxu0
  %v134 = vmax.f32 %v116, 0.0
  %v135 = vmax.f32 %v118, 0.0
  %v136 = vmax.f32 %v120, 0.0
  %v137 = vmax.f32 %v122, 0.0
  %v138 = vmax.f32 %v126, 0.0
  %v139 = vmax.f32 %v128, 0.0
  %v140 = vmax.f32 %v130, 0.0
  %v141 = vmax.f32 %v132, 0.0
  %v142 = vld [vmem:[%s3] sm:$0xf]
  %v143 = vld [vmem:[%s3 + $0x4] sm:$0xf]
  %v144 = vld [vmem:[%s3 + $0x8] sm:$0xf]
  %v145 = vpack.c.bf16 %v136, %v134
  %v146 = vpack.c.bf16 %v137, %v135
  %v147 = vpack.c.bf16 %v140, %v138
  %v148 = vpack.c.bf16 %v141, %v139
  %v149 = vld [vmem:[%s4] sm:$0xff]
  %v150 = vld [vmem:[%s4 + $0x8] sm:$0xff]
  %v151 = vld [vmem:[%s4 + $0x10] sm:$0xff]
  %153 = vset.pattern.permute.xlu0 0
  %154 = vperm.xlu0 %153, %v149
  %v155 = vpop.permute.xlu0 %154
  %158 = vset.pattern.permute.xlu0 0
  %159 = vperm.xlu0 %158, %v150
  %v160 = vpop.permute.xlu0 %159
  %163 = vset.pattern.permute.xlu0 0
  %164 = vperm.xlu0 %163, %v151
  %v165 = vpop.permute.xlu0 %164
  %v170 = vunpack.c.l.b16 %v142
  %v171 = vunpack.c.l.b16 %v143
  %v172 = vunpack.c.l.b16 %v144
  %v173 = vpack.c.b16 %v171, %v170
  %v174 = vpack.c.b16 %v172, %v172
  %v176 = vsel %vm74, %v173, 0
  %v179 = vsel %vm74, %v174, 0
  %181 = vmatprep.subr.bf16.mxu0 0
  %182 = vmatpush1.bf16.msra.mxu0 0
  %183 = vmatprep.subr.bf16.mxu0 0
  %184 = vmatpush1.bf16.msra.mxu0 0
  %185 = vmatprep.subr.bf16.mxu0 0
  %186 = vmatpush1.bf16.msra.mxu0 0
  %187 = vmatprep.subr.bf16.mxu0 0
  %188 = vmatpush1.bf16.msra.mxu0 0
  %189 = vmatprep.subr.bf16.mxu0 0
  %190 = vmatpush1.bf16.msra.mxu0 0
  %191 = vmatprep.subr.bf16.mxu0 0
  %192 = vmatpush1.bf16.msra.mxu0 0
  %193 = vmatprep.subr.bf16.mxu0 %v148
  %194 = vmatpush1.bf16.msra.mxu0 %v147
  %195 = vmatprep.subr.bf16.mxu0 %v146
  %196 = vmatpush1.bf16.msra.mxu0 %v145
  %197 = vmatprep.subr.bf16.mxu0 0
  %198 = vmatpush2.bf16.msra.mxu0 0
  %199 = vmatprep.subr.bf16.mxu0 0
  %200 = vmatpush2.bf16.msra.mxu0 0
  %201 = vmatprep.subr.bf16.mxu0 0
  %202 = vmatpush2.bf16.msra.mxu0 0
  %203 = vmatprep.subr.bf16.mxu0 0
  %204 = vmatpush2.bf16.msra.mxu0 0
  %205 = vmatprep.subr.bf16.mxu0 0
  %206 = vmatpush2.bf16.msra.mxu0 0
  %207 = vmatprep.subr.bf16.mxu0 0
  %208 = vmatpush2.bf16.msra.mxu0 0
  %209 = vmatprep.subr.bf16.mxu0 0
  %210 = vmatpush2.bf16.msra.mxu0 0
  %211 = vmatprep.subr.bf16.mxu0 0
  %212 = vmatpush2.bf16.msra.mxu0 0
  %213 = vmatprep.mubr.bf16.mxu0 0
  %214 = vmatmul.mubr.bf16.gmra.mxu0 %v176
  %v215 = vpop.f32.mrf.mxu0
  %v216 = vadd.f32 %v155, %v215
  %v217 = vpop.f32.mrf.mxu0
  %v218 = vadd.f32 %v155, %v217
  %v219 = vpop.f32.mrf.mxu0
  %v220 = vadd.f32 %v160, %v219
  %v221 = vpop.f32.mrf.mxu0
  %v222 = vadd.f32 %v160, %v221
  %223 = vmatprep.mubr.bf16.mxu0 0
  %224 = vmatmul.mubr.bf16.gmra.mxu0 %v179
  %v225 = vpop.f32.mrf.mxu0
  %v226 = vadd.f32 %v165, %v225
  %v227 = vpop.f32.mrf.mxu0
  %v228 = vadd.f32 %v165, %v227
  %v229 = vpop.f32.mrf.mxu0
  %v230 = vpop.f32.mrf.mxu0
  %231 = vdwg.mxu0
  %v232 = vsub.f32 0.0, %v216
  %v233 = vsub.f32 0.0, %v218
  %v234 = vmul.f32 %v232, 1.442695
  %v235 = vpow.pop %v234
  %v236 = vmul.f32 %v233, 1.442695
  %v237 = vpow.pop %v236
  %v238 = vadd.f32 %v235, 1.0
  %v239 = vadd.f32 %v237, 1.0
  %v240 = vrcp.pop %v238
  %v241 = vmul.f32 1.0, %v240
  %v242 = vrcp.pop %v239
  %v243 = vmul.f32 1.0, %v242
  %244 = vst [vmem:[%s6] sm:$0x3f] %v241
  %245 = vst [vmem:[%s6 + $0x8] sm:$0x3f] %v243
  %vm246 = vcmask 1042432
  %v247 = vsel %vm246, %v241, -inf
  %v248 = vrot.slane %v247, 4
  %v249 = vmax.f32 %v247, %v248
  %v250 = vrot.slane %v249, 2
  %v251 = vmax.f32 %v249, %v250
  %v252 = vrot.slane %v251, 1
  %v253 = vmax.f32 %v251, %v252
  %v254 = vsel %vm246, %v243, -inf
  %v255 = vrot.slane %v254, 4
  %v256 = vmax.f32 %v254, %v255
  %v257 = vrot.slane %v256, 2
  %v258 = vmax.f32 %v256, %v257
  %v259 = vrot.slane %v258, 1
  %v260 = vmax.f32 %v258, %v259
  %v263 = vcombine.low %v253, %v260
  %v265 = vunpack.c.l.s4 1966171168
  %v266 = vunpack.c.0.s8 %v265
  %v267 = vlaneseq
  %v268 = vshrl.u32 %v267, 7
  %v269 = vsub.s32 %v266, %v268
  %v270 = vrot.slane %v263, %v269
  %v272 = vunpack.c.l.s4 1966171168
  %v273 = vunpack.c.0.s8 %v272
  %v274 = vlaneseq
  %v275 = vshrl.u32 %v274, 7
  %v276 = vsub.s32 %v273, %v275
  %v277 = vrot.slane %v270, %v276
  %v279 = vlaneseq
  %vm280 = vcmp.ge.s32.totalorder %v279, 0
  %vm281 = vcmp.lt.s32.totalorder %v279, 256
  %vm282 = vmand %vm280, %vm281
  %s283 = scalar_lea.vmem %s6, 6
  %284 = vst.msk [vmem:[%s283] ss:$8 sm:$0x3] %vm282, %v277
  %285 = vst.msk [vmem:[%s283] ss:$8 sm:$0x0] %vm282, %v277
  %v288 = vrot.slane %v226, 7
  %v289 = vrot.slane %v228, 7
  %vm292 = vcmp.gt.f32.partialorder %v226, %v288
  %vm293 = vcmp.gt.f32.partialorder %v228, %v289
  %v294 = vsel %vm292, 1, 0
  %v295 = vsel %vm293, 1, 0
  %v296 = vcvt.s32.f32 %v294
  %v297 = vcvt.s32.f32 %v295
  %v300 = vcombine.high %v296, %v297
  %v302 = vunpack.c.l.s4 1966171168
  %v303 = vunpack.c.0.s8 %v302
  %v304 = vlaneseq
  %v305 = vshrl.u32 %v304, 7
  %v306 = vsub.s32 %v303, %v305
  %v307 = vrot.slane %v300, %v306
  %v308 = vcombine.high %v307, %v307
  %v310 = vunpack.c.l.s4 1966171168
  %v311 = vunpack.c.0.s8 %v310
  %v312 = vlaneseq
  %v313 = vshrl.u32 %v312, 7
  %v314 = vsub.s32 %v311, %v313
  %v315 = vrot.slane %v308, %v314
  %s317 = scalar_lea.vmem %s6, 16
  %318 = vst.msk [vmem:[%s317] ss:$8 sm:$0x3] %vm282, %v315
  %319 = vst.msk [vmem:[%s317] ss:$8 sm:$0x0] %vm282, %v315
  %vm320 = vcmask 1045507
  %v321 = vsel %vm320, %v241, -inf
  %v322 = vrot.slane %v321, 4
  %v323 = vmax.f32 %v321, %v322
  %v324 = vrot.slane %v323, 2
  %v325 = vmax.f32 %v323, %v324
  %v326 = vrot.slane %v325, 1
  %v327 = vmax.f32 %v325, %v326
  %v328 = vsel %vm320, %v243, -inf
  %v329 = vrot.slane %v328, 4
  %v330 = vmax.f32 %v328, %v329
  %v331 = vrot.slane %v330, 2
  %v332 = vmax.f32 %v330, %v331
  %v333 = vrot.slane %v332, 1
  %v334 = vmax.f32 %v332, %v333
  %v337 = vcombine.low %v327, %v334
  %v339 = vunpack.c.l.s4 1966171168
  %v340 = vunpack.c.0.s8 %v339
  %v341 = vlaneseq
  %v342 = vshrl.u32 %v341, 7
  %v343 = vsub.s32 %v340, %v342
  %v344 = vrot.slane %v337, %v343
  %v346 = vunpack.c.l.s4 1966171168
  %v347 = vunpack.c.0.s8 %v346
  %v348 = vlaneseq
  %v349 = vshrl.u32 %v348, 7
  %v350 = vsub.s32 %v347, %v349
  %v351 = vrot.slane %v344, %v350
  %s353 = scalar_lea.vmem %s6, 7
  %354 = vst.msk [vmem:[%s353] ss:$8 sm:$0x3] %vm282, %v351
  %355 = vst.msk [vmem:[%s353] ss:$8 sm:$0x0] %vm282, %v351
  %v356 = vcombine.high %v315, %v315
  %s358 = scalar_lea.vmem %s6, 17
  %359 = vst.msk [vmem:[%s358] ss:$8 sm:$0x3] %vm282, %v356
  %360 = vst.msk [vmem:[%s358] ss:$8 sm:$0x0] %vm282, %v356
  %v361 = vld [vmem:[%s5] sm:$0xff]
  %v362 = vld [vmem:[%s5 + $0x8] sm:$0xff]
  %v363 = vld [vmem:[%s5 + $0x10] sm:$0x3f]
  %v364 = vld [vmem:[%s5 + $0x18] sm:$0x3f]
  %s365 = scalar_lea.vmem %s5, 32
  %v366 = vld [vmem:[%s365] sm:$0xff]
  %v367 = vld [vmem:[%s365 + $0x8] sm:$0xff]
  %v368 = vld [vmem:[%s365 + $0x10] sm:$0x3f]
  %v369 = vld [vmem:[%s365 + $0x18] sm:$0x3f]
  %s370 = scalar_lea.vmem %s5, 64
  %v371 = vld [vmem:[%s370] sm:$0xff]
  %v372 = vld [vmem:[%s370 + $0x8] sm:$0xff]
  %v373 = vld [vmem:[%s370 + $0x10] sm:$0x3f]
  %v374 = vld [vmem:[%s370 + $0x18] sm:$0x3f]
  %s375 = scalar_lea.vmem %s5, 96
  %v376 = vld [vmem:[%s375] sm:$0xff]
  %v377 = vld [vmem:[%s375 + $0x8] sm:$0xff]
  %v378 = vld [vmem:[%s375 + $0x10] sm:$0x3f]
  %v379 = vld [vmem:[%s375 + $0x18] sm:$0x3f]
  %vm380 = vcmp.gt.f32.partialorder %v371, 0.5
  %vm381 = vcmp.gt.f32.partialorder %v372, 0.5
  %vm382 = vcmp.gt.f32.partialorder %v373, 0.5
  %vm383 = vcmp.gt.f32.partialorder %v374, 0.5
  %v384 = vmul.f32 %v216, 1.442695
  %v385 = vpow.pop %v384
  %v386 = vmul.f32 %v218, 1.442695
  %v387 = vpow.pop %v386
  %v388 = vmul.f32 %v220, 1.442695
  %v389 = vpow.pop %v388
  %v390 = vmul.f32 %v222, 1.442695
  %v391 = vpow.pop %v390
  %v392 = vmul.f32 %v226, 1.442695
  %v393 = vpow.pop %v392
  %v394 = vmul.f32 %v228, 1.442695
  %v395 = vpow.pop %v394
  %vm402 = vcmask 1041408
  %v403 = vrot.slane %v385, 6
  %v404 = vrot.slane %v389, 6
  %v405 = vsel %vm402, %v403, %v404
  %v406 = vrot.slane %v387, 6
  %v407 = vrot.slane %v391, 6
  %v408 = vsel %vm402, %v406, %v407
  %v409 = vrot.slane %v393, 6
  %v410 = vsel %vm402, %v404, %v409
  %v411 = vrot.slane %v395, 6
  %v412 = vsel %vm402, %v407, %v411
  %v421 = vrot.slane %v216, 6
  %v422 = vrot.slane %v220, 6
  %v423 = vsel %vm402, %v421, %v422
  %v424 = vrot.slane %v218, 6
  %v425 = vrot.slane %v222, 6
  %v426 = vsel %vm402, %v424, %v425
  %v427 = vrot.slane %v226, 6
  %v428 = vsel %vm402, %v422, %v427
  %v429 = vrot.slane %v228, 6
  %v430 = vsel %vm402, %v425, %v429
  %v435 = vsel %vm380, %v405, %v423
  %v436 = vsel %vm381, %v408, %v426
  %v437 = vsel %vm382, %v410, %v428
  %v438 = vsel %vm383, %v412, %v430
  %v439 = vmul.f32 %v435, %v361
  %v440 = vmul.f32 %v436, %v362
  %v441 = vmul.f32 %v437, %v363
  %v442 = vmul.f32 %v438, %v364
  %v443 = vadd.f32 %v439, %v366
  %v444 = vadd.f32 %v440, %v367
  %v445 = vadd.f32 %v441, %v368
  %v446 = vadd.f32 %v442, %v369
  %vm451 = vcmask 1044480
  %v452 = vrot.slane %v443, 3
  %v453 = vrot.slane %v445, 3
  %v454 = vsel %vm451, %v452, %v453
  %v455 = vrot.slane %v444, 3
  %v456 = vrot.slane %v446, 3
  %v457 = vsel %vm451, %v455, %v456
  %v462 = vrot.slane %v443, 5
  %v463 = vrot.slane %v444, 5
  %v466 = vsel %vm246, %v453, %v462
  %v467 = vsel %vm246, %v456, %v463
  %v468 = vmul.f32 %v376, %v454
  %v469 = vmul.f32 %v377, %v457
  %v470 = vmul.f32 %v378, %v466
  %v471 = vmul.f32 %v379, %v467
  %v472 = vadd.f32 %v443, %v468
  %v473 = vadd.f32 %v444, %v469
  %v474 = vadd.f32 %v445, %v470
  %v475 = vadd.f32 %v446, %v471
  %v480 = vrot.slane %v472, 6
  %v481 = vrot.slane %v473, 6
  %v482 = vrot.slane %v474, 6
  %v483 = vsel %vm402, %v480, %v482
  %v484 = vrot.slane %v475, 6
  %v485 = vsel %vm402, %v481, %v484
  %490 = vst [vmem:[%s6 + $0x10] sm:$0xfc] %v480
  %491 = vst [vmem:[%s6 + $0x18] sm:$0xfc] %v481
  %492 = vst [vmem:[%s6 + $0x20] sm:$0xff] %v483
  %493 = vst [vmem:[%s6 + $0x28] sm:$0xff] %v485
  // Predicated region
  $region26: #{_forward.1} parent=0 // pred_check
    _
  $region27: #{_forward.1} parent=0 // pred_check_branch
    %495 = sbr.rel (0) target = $region29
  $region28: #{_forward.1} parent=0 // pred_region
    _
  $region29: #{_forward.1} parent=0 // pred_fallthru
    _
  // Predicated region
  $region30: #{_forward.1} parent=0 // pred_check
    _
  $region31: #{_forward.1} parent=0 // pred_check_branch
    %497 = sbr.rel (0) target = $region33
  $region32: #{_forward.1} parent=0 // pred_region
    _
  $region33: #{_forward.1} parent=0 // pred_fallthru
    _

</llo_original>
